<compile_context>
chip_gen: v6e
topology: v6e:2x2x1
jax: 0.10.0
libtpu: 0.0.40
codegen_flags: <defaults>
</compile_context>

<pallas_src>
from functools import partial

import jax
import jax.numpy as jnp
from jax.experimental import pallas as pl
from jax.experimental.pallas import tpu as pltpu


_SMALL_C_MAX = 128          # <= this: use the MXU tile-transpose path
_MAX_LANE_TILE = 32768      # upper bound on the batch tile (lanes)


def _vmem_budget():
    """(per-tile VMEM byte budget, vmem_limit_bytes) derived from the chip."""
    try:
        cap = int(pltpu.get_tpu_info().vmem_capacity_bytes)
    except Exception:
        cap = 64 * 1024 * 1024            # conservative (v7x-sized) fallback
    tile_budget = max(2 * 1024 * 1024, min(cap // 6, 16 * 1024 * 1024))
    vmem_limit = min(cap // 2, 32 * 1024 * 1024)
    return tile_budget, vmem_limit


def _pick_tb(batch, num_classes, itemsize, tile_budget, block_b=None):
    """Batch (lane) tile size: big enough to amortize per-grid-step overhead,
    bounded by the VMEM budget (double-buffered input + f32 temporaries)."""
    if batch <= 128:
        return batch                       # single full-array block
    if block_b is None:
        per_sample = num_classes * (2 * itemsize + 12) + 64
        tb = max(128, tile_budget // per_sample)
    else:
        tb = int(block_b)
    tb = min(tb, 128 * (batch // 128), _MAX_LANE_TILE)
    tb = max(128, (tb // 128) * 128)
    return tb


def _amsfe_partial_kernel(preds_ref, target_ref, out_ref, *, others_idx, batch,
                          block_b, num_classes, use_mxu_transpose):
    i = pl.program_id(0)
    x = preds_ref[...]                                   # (tb, C), native dtype

    if use_mxu_transpose:
        # Small C: transpose the tile to class-major (C, tb) on the MXU
        # (identity NT matmul) so exp/softmax run with full lane density.
        mm_dtype = x.dtype if x.dtype in (jnp.float32, jnp.bfloat16) else jnp.float32
        xm = x.astype(mm_dtype)
        r = jax.lax.broadcasted_iota(jnp.int32, (num_classes, num_classes), 0)
        c = jax.lax.broadcasted_iota(jnp.int32, (num_classes, num_classes), 1)
        ident = (r == c).astype(jnp.float32).astype(mm_dtype)
        xt = jax.lax.dot_general(                         # (C, tb) in f32
            ident, xm, (((1,), (1,)), ((), ())),
            preferred_element_type=jnp.float32)
        m = jnp.max(xt, axis=0, keepdims=True)            # (1, tb)
        e = jnp.exp(xt - m)                               # (C, tb)   (EUP)
        denom = jnp.sum(e, axis=0, keepdims=True)         # (1, tb)
        inv = 1.0 / denom                                 # exact reciprocal
        p_oth = e[others_idx:others_idx + 1, :] * inv     # (1, tb)
        tgt = target_ref[...]                             # (1, tb) int32
        sample = jax.lax.broadcasted_iota(jnp.int32, (1, block_b), 1)
    else:
        # Large C: compute directly in (tb, C); class axis is lane-dense.
        xf = x.astype(jnp.float32)                        # (tb, C)
        m = jnp.max(xf, axis=1, keepdims=True)            # (tb, 1)
        e = jnp.exp(xf - m)                               # (tb, C)
        denom = jnp.sum(e, axis=1, keepdims=True)         # (tb, 1)
        cls = jax.lax.broadcasted_iota(jnp.int32, (block_b, num_classes), 1)
        e_oth = jnp.sum(jnp.where(cls == others_idx, e, 0.0),
                        axis=1, keepdims=True)            # (tb, 1)
        inv = 1.0 / denom
        p_oth = e_oth * inv                               # (tb, 1)
        tgt = target_ref[...]                             # (tb, 1) int32
        sample = jax.lax.broadcasted_iota(jnp.int32, (block_b, 1), 0)

    # Per-sample contributions (same algebra as the reference loop:
    # row-sum of a softmax is 1, and 0.5*((-p)^2 + p^2) == p^2).
    fne_c = (1.0 - p_oth) ** 2
    fpe_c = p_oth * p_oth

    # Masks: "others" rows vs the rest; the clipped last block is excluded.
    valid = (i * block_b + sample) < batch
    is_oth = tgt == others_idx
    fne_mask = jnp.logical_and(valid, is_oth)
    fpe_mask = jnp.logical_and(valid, jnp.logical_not(is_oth))

    zero = jnp.zeros_like(fne_c)
    fne_sum = jnp.sum(jnp.where(fne_mask, fne_c, zero))
    fpe_sum = jnp.sum(jnp.where(fpe_mask, fpe_c, zero))
    fne_cnt = jnp.sum(fne_mask.astype(jnp.float32))
    # (fpe count is derived in the wrapper as batch - fne count)

    lane = jax.lax.broadcasted_iota(jnp.int32, (1, 128), 1)
    row = jnp.where(lane == 0, fne_sum, 0.0)
    row = jnp.where(lane == 1, fpe_sum, row)
    row = jnp.where(lane == 2, fne_cnt, row)
    out_ref[...] = jnp.broadcast_to(row.reshape(1, 1, 128), (1, 8, 128))


def amsfe_loss(preds, target, *, alpha, others_idx, block_b=None):
    """AMSFELoss forward. preds: (B, C) float (any dtype), target: (B,) int.

    Returns a scalar float32 loss matching the PyTorch reference loop
    (up to fp rounding).  Like the reference, the result is inf/nan if either
    the 'others' or 'non-others' group is absent from the batch.
    """
    B, C = preds.shape
    assert 0 <= int(others_idx) < C, "others_idx out of range for class axis"
    use_mxu = C <= _SMALL_C_MAX

    tile_budget, vmem_limit = _vmem_budget()
    tb = _pick_tb(B, C, preds.dtype.itemsize, tile_budget, block_b)
    num_blocks = (B + tb - 1) // tb

    preds_spec = pl.BlockSpec((tb, C), lambda i: (i, 0))
    if use_mxu:
        target_2d = target.reshape(1, B).astype(jnp.int32)   # samples on lanes
        tgt_spec = pl.BlockSpec((1, tb), lambda i: (0, i))
    else:
        target_2d = target.reshape(B, 1).astype(jnp.int32)   # samples on sublanes
        tgt_spec = pl.BlockSpec((tb, 1), lambda i: (i, 0))

    partials = pl.pallas_call(
        partial(_amsfe_partial_kernel,
                others_idx=int(others_idx), batch=int(B), block_b=int(tb),
                num_classes=int(C), use_mxu_transpose=use_mxu),
        out_shape=jax.ShapeDtypeStruct((num_blocks, 8, 128), jnp.float32),
        grid_spec=pltpu.PrefetchScalarGridSpec(
            num_scalar_prefetch=0,
            grid=(num_blocks,),
            in_specs=[preds_spec, tgt_spec],
            out_specs=pl.BlockSpec((1, 8, 128), lambda i: (i, 0, 0)),
        ),
        compiler_params=pltpu.CompilerParams(
            dimension_semantics=("parallel",),
            vmem_limit_bytes=int(vmem_limit)),
    )(preds, target_2d)

    # Tiny epilogue on the (num_blocks, 128) partials in plain jnp.
    sums = jnp.sum(partials[:, 0, :], axis=0)
    fne_sum, fpe_sum, fne_cnt = sums[0], sums[1], sums[2]
    fpe_cnt = jnp.float32(B) - fne_cnt
    fne = fne_sum / fne_cnt
    fpe = fpe_sum / fpe_cnt
    a = float(alpha)
    return (1.0 - a) ** 2 * fpe * fpe + a ** 2 * fne * fne


def _reference(preds, target, alpha, others_idx):
    # pure-JAX reference mirroring the PyTorch loop semantics
    p = jax.nn.softmax(preds.astype(jnp.float32), axis=1)
    p_o = p[:, others_idx]
    row_sum = jnp.sum(p, axis=1)
    is_o = target == others_idx
    fne_c = 0.5 * ((row_sum - p_o) ** 2 + (p_o - 1.0) ** 2)
    fpe_c = 0.5 * ((-p_o) ** 2 + p_o ** 2)
    fne = jnp.sum(jnp.where(is_o, fne_c, 0.0)) / jnp.sum(is_o)
    fpe = jnp.sum(jnp.where(is_o, 0.0, fpe_c)) / jnp.sum(~is_o)
    return (1.0 - alpha) ** 2 * fpe ** 2 + alpha ** 2 * fne ** 2


if __name__ == "__main__":
    key = jax.random.PRNGKey(0)
    alpha = 0.25

    # 1) small-C path (in-kernel MXU tile transpose), single block, f32
    B, C, oth = 256, 16, 3
    k1, k2 = jax.random.split(key)
    preds = jax.random.normal(k1, (B, C), dtype=jnp.float32)
    target = jax.random.randint(k2, (B,), 0, C, dtype=jnp.int32)
    target = target.at[0].set(oth).at[1].set((oth + 1) % C)   # both groups present
    loss = jax.block_until_ready(
        amsfe_loss(preds, target, alpha=alpha, others_idx=oth))
    ref = _reference(preds, target, alpha, oth)
    assert jnp.allclose(loss, ref, rtol=1e-5, atol=1e-6), (loss, ref)

    # 2) large-C path (no transpose), multi-block grid with a clipped last block
    B2, C2, oth2 = 300, 192, 7
    k3, k4 = jax.random.split(k1)
    preds2 = jax.random.normal(k3, (B2, C2), dtype=jnp.float32)
    target2 = jax.random.randint(k4, (B2,), 0, C2, dtype=jnp.int32)
    target2 = target2.at[0].set(oth2).at[1].set((oth2 + 1) % C2)
    loss2 = jax.block_until_ready(
        amsfe_loss(preds2, target2, alpha=alpha, others_idx=oth2, block_b=128))
    ref2 = _reference(preds2, target2, alpha, oth2)
    assert jnp.allclose(loss2, ref2, rtol=1e-5, atol=1e-6), (loss2, ref2)

    # 3) bf16 inputs DMA'd natively (no wrapper up-cast), multi-block + clipping
    B3, C3, oth3 = 200, 16, 5
    k5, k6 = jax.random.split(k3)
    preds3 = jax.random.normal(k5, (B3, C3), dtype=jnp.bfloat16)
    target3 = jax.random.randint(k6, (B3,), 0, C3, dtype=jnp.int32)
    target3 = target3.at[0].set(oth3).at[1].set((oth3 + 1) % C3)
    loss3 = jax.block_until_ready(
        amsfe_loss(preds3, target3, alpha=alpha, others_idx=oth3))
    ref3 = _reference(preds3, target3, alpha, oth3)
    assert jnp.allclose(loss3, ref3, rtol=2e-3, atol=1e-5), (loss3, ref3)

    print("KERNEL_OK")
</pallas_src>

<mosaic_0001>
module attributes {stable_mosaic.version = 11 : i64} {
  func.func @_amsfe_partial_kernel(%arg0: i32, %arg1: memref<256x16xf32, #tpu.memory_space<vmem>>, %arg2: memref<1x256xi32, #tpu.memory_space<vmem>>, %arg3: memref<1x8x128xf32, #tpu.memory_space<vmem>>) attributes {dimension_semantics = [#tpu.dimension_semantics<parallel>], iteration_bounds = array<i64: 1>, scalar_prefetch = 0 : i64, scratch_operands = 0 : i64, tpu.core_type = #tpu.core_type<tc>, window_params = [{transform_indices = @transform_0, window_bounds = array<i64: 256, 16>}, {transform_indices = @transform_1, window_bounds = array<i64: 1, 256>}, {transform_indices = @transform_2, window_bounds = array<i64: 1, 8, 128>}]} {
    %c0 = arith.constant 0 : index
    %c0_0 = arith.constant 0 : index
    %0 = vector.load %arg1[%c0, %c0_0] : memref<256x16xf32, #tpu.memory_space<vmem>>, vector<256x16xf32>
    %1 = tpu.iota {dimensions = array<i32: 0>} : vector<16x16xi32>
    %2 = tpu.iota {dimensions = array<i32: 1>} : vector<16x16xi32>
    %3 = arith.cmpi eq, %1, %2 : vector<16x16xi32>
    %4 = arith.extui %3 : vector<16x16xi1> to vector<16x16xi32>
    %5 = arith.sitofp %4 : vector<16x16xi32> to vector<16x16xf32>
    %cst = arith.constant dense<0.000000e+00> : vector<16x256xf32>
    %6 = tpu.matmul %5, %0, %cst {dimension_numbers = #tpu.dot_dimension_numbers<[1], [1], [0], [0], [0, 0, 1, 0], [], []>} : vector<16x16xf32>, vector<256x16xf32>, vector<16x256xf32> -> vector<16x256xf32>
    %cst_1 = arith.constant dense<0xFF800000> : vector<256xf32>
    %7 = vector.multi_reduction <maximumf>, %6, %cst_1 [0] : vector<16x256xf32> to vector<256xf32>
    %8 = vector.shape_cast %7 : vector<256xf32> to vector<1x256xf32>
    %9 = vector.broadcast %8 : vector<1x256xf32> to vector<16x256xf32>
    %10 = arith.subf %6, %9 : vector<16x256xf32>
    %11 = math.exp %10 : vector<16x256xf32>
    %cst_2 = arith.constant dense<0.000000e+00> : vector<256xf32>
    %12 = vector.multi_reduction <add>, %11, %cst_2 [0] : vector<16x256xf32> to vector<256xf32>
    %13 = vector.shape_cast %12 : vector<256xf32> to vector<1x256xf32>
    %cst_3 = arith.constant 1.000000e+00 : f32
    %14 = vector.broadcast %cst_3 : f32 to vector<1x256xf32>
    %15 = arith.divf %14, %13 : vector<1x256xf32>
    %16 = vector.extract_strided_slice %11 {offsets = [3, 0], sizes = [1, 256], strides = [1, 1]} : vector<16x256xf32> to vector<1x256xf32>
    %17 = arith.mulf %16, %15 : vector<1x256xf32>
    %c0_4 = arith.constant 0 : index
    %c0_5 = arith.constant 0 : index
    %18 = vector.load %arg2[%c0_4, %c0_5] : memref<1x256xi32, #tpu.memory_space<vmem>>, vector<1x256xi32>
    %19 = tpu.iota {dimensions = array<i32: 1>} : vector<1x256xi32>
    %cst_6 = arith.constant 1.000000e+00 : f32
    %20 = vector.broadcast %cst_6 : f32 to vector<1x256xf32>
    %21 = arith.subf %20, %17 : vector<1x256xf32>
    %22 = arith.mulf %21, %21 : vector<1x256xf32>
    %23 = arith.mulf %17, %17 : vector<1x256xf32>
    %c256_i32 = arith.constant 256 : i32
    %24 = arith.muli %arg0, %c256_i32 : i32
    %25 = vector.broadcast %24 : i32 to vector<1x256xi32>
    %26 = arith.addi %25, %19 : vector<1x256xi32>
    %c256_i32_7 = arith.constant 256 : i32
    %27 = vector.broadcast %c256_i32_7 : i32 to vector<1x256xi32>
    %28 = arith.cmpi slt, %26, %27 : vector<1x256xi32>
    %c3_i32 = arith.constant 3 : i32
    %29 = vector.broadcast %c3_i32 : i32 to vector<1x256xi32>
    %30 = arith.cmpi eq, %18, %29 : vector<1x256xi32>
    %31 = arith.andi %28, %30 : vector<1x256xi1>
    %cst_8 = arith.constant dense<true> : vector<1x256xi1>
    %32 = arith.xori %30, %cst_8 : vector<1x256xi1>
    %33 = arith.andi %28, %32 : vector<1x256xi1>
    %cst_9 = arith.constant 0.000000e+00 : f32
    %34 = vector.broadcast %cst_9 : f32 to vector<1x256xf32>
    %35 = arith.select %31, %22, %34 : vector<1x256xi1>, vector<1x256xf32>
    %36 = vector.shape_cast %35 : vector<1x256xf32> to vector<1x1x256xf32>
    %cst_10 = arith.constant dense<0.000000e+00> : vector<1xf32>
    %37 = vector.multi_reduction <add>, %36, %cst_10 [1, 2] : vector<1x1x256xf32> to vector<1xf32>
    %38 = vector.shape_cast %37 : vector<1xf32> to vector<1x1x1xf32>
    %39 = vector.extract %38[0, 0, 0] : f32 from vector<1x1x1xf32>
    %40 = arith.select %33, %23, %34 : vector<1x256xi1>, vector<1x256xf32>
    %41 = vector.shape_cast %40 : vector<1x256xf32> to vector<1x1x256xf32>
    %cst_11 = arith.constant dense<0.000000e+00> : vector<1xf32>
    %42 = vector.multi_reduction <add>, %41, %cst_11 [1, 2] : vector<1x1x256xf32> to vector<1xf32>
    %43 = vector.shape_cast %42 : vector<1xf32> to vector<1x1x1xf32>
    %44 = vector.extract %43[0, 0, 0] : f32 from vector<1x1x1xf32>
    %45 = arith.extui %31 : vector<1x256xi1> to vector<1x256xi32>
    %46 = arith.sitofp %45 : vector<1x256xi32> to vector<1x256xf32>
    %47 = vector.shape_cast %46 : vector<1x256xf32> to vector<1x1x256xf32>
    %cst_12 = arith.constant dense<0.000000e+00> : vector<1xf32>
    %48 = vector.multi_reduction <add>, %47, %cst_12 [1, 2] : vector<1x1x256xf32> to vector<1xf32>
    %49 = vector.shape_cast %48 : vector<1xf32> to vector<1x1x1xf32>
    %50 = vector.extract %49[0, 0, 0] : f32 from vector<1x1x1xf32>
    %51 = tpu.iota {dimensions = array<i32: 1>} : vector<1x128xi32>
    %c0_i32 = arith.constant 0 : i32
    %52 = vector.broadcast %c0_i32 : i32 to vector<1x128xi32>
    %53 = arith.cmpi eq, %51, %52 : vector<1x128xi32>
    %cst_13 = arith.constant 0.000000e+00 : f32
    %54 = vector.broadcast %39 : f32 to vector<1x128xf32>
    %55 = vector.broadcast %cst_13 : f32 to vector<1x128xf32>
    %56 = arith.select %53, %54, %55 : vector<1x128xi1>, vector<1x128xf32>
    %c1_i32 = arith.constant 1 : i32
    %57 = vector.broadcast %c1_i32 : i32 to vector<1x128xi32>
    %58 = arith.cmpi eq, %51, %57 : vector<1x128xi32>
    %59 = vector.broadcast %44 : f32 to vector<1x128xf32>
    %60 = arith.select %58, %59, %56 : vector<1x128xi1>, vector<1x128xf32>
    %c2_i32 = arith.constant 2 : i32
    %61 = vector.broadcast %c2_i32 : i32 to vector<1x128xi32>
    %62 = arith.cmpi eq, %51, %61 : vector<1x128xi32>
    %63 = vector.broadcast %50 : f32 to vector<1x128xf32>
    %64 = arith.select %62, %63, %60 : vector<1x128xi1>, vector<1x128xf32>
    %65 = vector.shape_cast %64 : vector<1x128xf32> to vector<1x1x128xf32>
    %66 = vector.shape_cast %65 : vector<1x1x128xf32> to vector<1x1x128xf32>
    %67 = vector.broadcast %66 : vector<1x1x128xf32> to vector<1x8x128xf32>
    %c0_14 = arith.constant 0 : index
    %c0_15 = arith.constant 0 : index
    %c0_16 = arith.constant 0 : index
    %68 = vector.load %arg3[%c0_14, %c0_15, %c0_16] : memref<1x8x128xf32, #tpu.memory_space<vmem>>, vector<1x8x128xf32>
    tpu.vector_store %arg3[%c0_14, %c0_15, %c0_16], %67 {strides = array<i32>} : memref<1x8x128xf32, #tpu.memory_space<vmem>>, vector<1x8x128xf32>,
    return
  }
  func.func @transform_0(%arg0: i32) -> (i32, i32) {
    %c0_i32 = arith.constant 0 : i32
    %c0_i32_0 = arith.constant 0 : i32
    return %arg0, %c0_i32 : i32, i32
  }
  func.func @transform_1(%arg0: i32) -> (i32, i32) {
    %c0_i32 = arith.constant 0 : i32
    %c0_i32_0 = arith.constant 0 : i32
    return %c0_i32, %arg0 : i32, i32
  }
  func.func @transform_2(%arg0: i32) -> (i32, i32, i32) {
    %c0_i32 = arith.constant 0 : i32
    %c0_i32_0 = arith.constant 0 : i32
    %c0_i32_1 = arith.constant 0 : i32
    return %arg0, %c0_i32, %c0_i32_0 : i32, i32, i32
  }
}

</mosaic_0001>

<llo_original>
// kernel: tpu_custom_call.1
$region0: #{tpu_custom_call.1}
  #allocation0 [shape = 'u32[]', space=smem, size = 0x4, offset = 0x4, fixed_abs, tag = 'smem constant byte address 0x4 - core index']
  #allocation1 [shape = 'u32[144,128]{1,0:T(1,128)}', space=vmem, size = 0x12000, scoped, tag = 'internal scratch']
  %s0 = inlined_call_operand.vmem [shape: f32[256,16], index: 0, kind: input, shape index: {}]
  %s1 = inlined_call_operand.vmem [shape: s32[1,256], index: 1, kind: input, shape index: {}]
  %s2 = inlined_call_operand.hbm [shape: f32[1,8,128], index: 2, kind: output, shape index: {}]
  %s3 = sld [smem:[#allocation0]]
  $region18: #{tpu_custom_call.1} parent=0
    _
  %s5 = ssub.s32 1, %s3
  %s6 = scalar_select 0, %s5, %s3
  $region1: #{tpu_custom_call.1} parent=0
    #allocation2 [shape = 'u8[4096]{0}', space=vmem, size = 0x1000, scoped, tag = 'output window, operand 0, single buffered']
    #allocation3 [shape = 's32[1]{0}', space=sflag, size = 0x4, scoped, tag = 'scoped memory for tpu_custom_call.1']
    %7 = vsyncpa [#allocation3], 0
    // Predicated region
    $region2: #{tpu_custom_call.1} parent=1 // pred_check
      _
    $region3: #{tpu_custom_call.1} parent=1 // pred_check_branch
      %9 = sbr.rel (0) target = $region5
    $region4: #{tpu_custom_call.1} parent=1 // pred_region
      _
    $region5: #{tpu_custom_call.1} parent=1 // pred_fallthru
      _
    // Predicated region
    $region6: #{tpu_custom_call.1} parent=1 // pred_check
      _
    $region7: #{tpu_custom_call.1} parent=1 // pred_check_branch
      %11 = sbr.rel (0) target = $region9
    $region8: #{tpu_custom_call.1} parent=1 // pred_region
      _
    $region9: #{tpu_custom_call.1} parent=1 // pred_fallthru
      _
    %v12 = vld [vmem:[%s0] sm:$0xff]
    %v13 = vld [vmem:[%s0 + $0x8] sm:$0xff]
    %v14 = vld [vmem:[%s0 + $0x10] sm:$0xff]
    %v15 = vld [vmem:[%s0 + $0x18] sm:$0xff]
    %v16 = vld [vmem:[%s0 + $0x20] sm:$0xff]
    %v17 = vld [vmem:[%s0 + $0x28] sm:$0xff]
    %v18 = vld [vmem:[%s0 + $0x30] sm:$0xff]
    %v19 = vld [vmem:[%s0 + $0x38] sm:$0xff]
    %v20 = vld [vmem:[%s0 + $0x40] sm:$0xff]
    %v21 = vld [vmem:[%s0 + $0x48] sm:$0xff]
    %v22 = vld [vmem:[%s0 + $0x50] sm:$0xff]
    %v23 = vld [vmem:[%s0 + $0x58] sm:$0xff]
    %v24 = vld [vmem:[%s0 + $0x60] sm:$0xff]
    %v25 = vld [vmem:[%s0 + $0x68] sm:$0xff]
    %v26 = vld [vmem:[%s0 + $0x70] sm:$0xff]
    %v27 = vld [vmem:[%s0 + $0x78] sm:$0xff]
    %v28 = vld [vmem:[%s0 + $0x80] sm:$0xff]
    %v29 = vld [vmem:[%s0 + $0x88] sm:$0xff]
    %v30 = vld [vmem:[%s0 + $0x90] sm:$0xff]
    %v31 = vld [vmem:[%s0 + $0x98] sm:$0xff]
    %v32 = vld [vmem:[%s0 + $0xa0] sm:$0xff]
    %v33 = vld [vmem:[%s0 + $0xa8] sm:$0xff]
    %v34 = vld [vmem:[%s0 + $0xb0] sm:$0xff]
    %v35 = vld [vmem:[%s0 + $0xb8] sm:$0xff]
    %v36 = vld [vmem:[%s0 + $0xc0] sm:$0xff]
    %v37 = vld [vmem:[%s0 + $0xc8] sm:$0xff]
    %v38 = vld [vmem:[%s0 + $0xd0] sm:$0xff]
    %v39 = vld [vmem:[%s0 + $0xd8] sm:$0xff]
    %v40 = vld [vmem:[%s0 + $0xe0] sm:$0xff]
    %v41 = vld [vmem:[%s0 + $0xe8] sm:$0xff]
    %v42 = vld [vmem:[%s0 + $0xf0] sm:$0xff]
    %v43 = vld [vmem:[%s0 + $0xf8] sm:$0xff]
    %v44 = vlaneseq
    %v45 = vshrl.u32 %v44, 7
    %v46 = vadd.s32 %v45, 8
    %v47 = vlaneseq
    %v48 = vand.u32 %v47, 127
    %vm49 = vcmp.eq.s32.totalorder %v45, %v48
    %vm50 = vcmp.eq.s32.totalorder %v46, %v48
    %v51 = vsel %vm49, 1, 0
    %v52 = vsel %vm50, 1, 0
    %v53 = vcvt.s32.f32 %v51
    %v54 = vcvt.s32.f32 %v52
    %vm55 = vcmask 130048
    %v57 = vsel %vm55, %v53, 0
    %v60 = vsel %vm55, %v54, 0
    %v63 = vsel %vm55, %v12, 0
    %v66 = vsel %vm55, %v13, 0
    %v69 = vsel %vm55, %v14, 0
    %v72 = vsel %vm55, %v15, 0
    %v75 = vsel %vm55, %v16, 0
    %v78 = vsel %vm55, %v17, 0
    %v81 = vsel %vm55, %v18, 0
    %v84 = vsel %vm55, %v19, 0
    %v87 = vsel %vm55, %v20, 0
    %v90 = vsel %vm55, %v21, 0
    %v93 = vsel %vm55, %v22, 0
    %v96 = vsel %vm55, %v23, 0
    %v99 = vsel %vm55, %v24, 0
    %v102 = vsel %vm55, %v25, 0
    %v105 = vsel %vm55, %v26, 0
    %v108 = vsel %vm55, %v27, 0
    %v111 = vsel %vm55, %v28, 0
    %v114 = vsel %vm55, %v29, 0
    %v117 = vsel %vm55, %v30, 0
    %v120 = vsel %vm55, %v31, 0
    %v123 = vsel %vm55, %v32, 0
    %v126 = vsel %vm55, %v33, 0
    %v129 = vsel %vm55, %v34, 0
    %v132 = vsel %vm55, %v35, 0
    %v135 = vsel %vm55, %v36, 0
    %v138 = vsel %vm55, %v37, 0
    %v141 = vsel %vm55, %v38, 0
    %v144 = vsel %vm55, %v39, 0
    %v147 = vsel %vm55, %v40, 0
    %v150 = vsel %vm55, %v41, 0
    %v153 = vsel %vm55, %v42, 0
    %v156 = vsel %vm55, %v43, 0
    %158 = vmatprep.subr.mxu0 0.0
    %159 = vmatpush1.xpose.msra.mxu0 %v108
    %160 = vmatprep.subr.mxu0 0.0
    %161 = vmatpush1.xpose.msra.mxu0 %v105
    %162 = vmatprep.subr.mxu0 0.0
    %163 = vmatpush1.xpose.msra.mxu0 %v102
    %164 = vmatprep.subr.mxu0 0.0
    %165 = vmatpush1.xpose.msra.mxu0 %v99
    %166 = vmatprep.subr.mxu0 0.0
    %167 = vmatpush1.xpose.msra.mxu0 %v96
    %168 = vmatprep.subr.mxu0 0.0
    %169 = vmatpush1.xpose.msra.mxu0 %v93
    %170 = vmatprep.subr.mxu0 0.0
    %171 = vmatpush1.xpose.msra.mxu0 %v90
    %172 = vmatprep.subr.mxu0 0.0
    %173 = vmatpush1.xpose.msra.mxu0 %v87
    %174 = vmatprep.subr.mxu0 0.0
    %175 = vmatpush1.xpose.msra.mxu0 %v84
    %176 = vmatprep.subr.mxu0 0.0
    %177 = vmatpush1.xpose.msra.mxu0 %v81
    %178 = vmatprep.subr.mxu0 0.0
    %179 = vmatpush1.xpose.msra.mxu0 %v78
    %180 = vmatprep.subr.mxu0 0.0
    %181 = vmatpush1.xpose.msra.mxu0 %v75
    %182 = vmatprep.subr.mxu0 0.0
    %183 = vmatpush1.xpose.msra.mxu0 %v72
    %184 = vmatprep.subr.mxu0 0.0
    %185 = vmatpush1.xpose.msra.mxu0 %v69
    %186 = vmatprep.subr.mxu0 0.0
    %187 = vmatpush1.xpose.msra.mxu0 %v66
    %188 = vmatprep.subr.mxu0 0.0
    %189 = vmatpush1.xpose.msra.mxu0 %v63
    %190 = vmatprep.subr.mxu0 0.0
    %191 = vmatpush2.xpose.msra.mxu0 %v156
    %192 = vmatprep.subr.mxu0 0.0
    %193 = vmatpush2.xpose.msra.mxu0 %v153
    %194 = vmatprep.subr.mxu0 0.0
    %195 = vmatpush2.xpose.msra.mxu0 %v150
    %196 = vmatprep.subr.mxu0 0.0
    %197 = vmatpush2.xpose.msra.mxu0 %v147
    %198 = vmatprep.subr.mxu0 0.0
    %199 = vmatpush2.xpose.msra.mxu0 %v144
    %200 = vmatprep.subr.mxu0 0.0
    %201 = vmatpush2.xpose.msra.mxu0 %v141
    %202 = vmatprep.subr.mxu0 0.0
    %203 = vmatpush2.xpose.msra.mxu0 %v138
    %204 = vmatprep.subr.mxu0 0.0
    %205 = vmatpush2.xpose.msra.mxu0 %v135
    %206 = vmatprep.subr.mxu0 0.0
    %207 = vmatpush2.xpose.msra.mxu0 %v132
    %208 = vmatprep.subr.mxu0 0.0
    %209 = vmatpush2.xpose.msra.mxu0 %v129
    %210 = vmatprep.subr.mxu0 0.0
    %211 = vmatpush2.xpose.msra.mxu0 %v126
    %212 = vmatprep.subr.mxu0 0.0
    %213 = vmatpush2.xpose.msra.mxu0 %v123
    %214 = vmatprep.subr.mxu0 0.0
    %215 = vmatpush2.xpose.msra.mxu0 %v120
    %216 = vmatprep.subr.mxu0 0.0
    %217 = vmatpush2.xpose.msra.mxu0 %v117
    %218 = vmatprep.subr.mxu0 0.0
    %219 = vmatpush2.xpose.msra.mxu0 %v114
    %220 = vmatprep.subr.mxu0 0.0
    %221 = vmatpush2.xpose.msra.mxu0 %v111
    %222 = vmatprep.mubr.f32.mxu0 0.0
    %223 = vmatmul.mubr.f32.gmra.mxu0 %v57
    %v224 = vpop.f32.mrf.mxu0
    %v225 = vadd.f32 0.0, %v224
    %v226 = vpop.f32.mrf.mxu0
    %v227 = vadd.f32 0.0, %v226
    %228 = vmatprep.mubr.f32.mxu0 0.0
    %229 = vmatmul.mubr.f32.gmra.mxu0 %v60
    %v230 = vpop.f32.mrf.mxu0
    %v231 = vadd.f32 0.0, %v230
    %v232 = vpop.f32.mrf.mxu0
    %v233 = vadd.f32 0.0, %v232
    %234 = vdwg.mxu0
    %v235 = vmax.f32 %v225, %v231
    %v236 = vrot.slane %v235, 4
    %v237 = vmax.f32 %v235, %v236
    %v238 = vrot.slane %v237, 2
    %v239 = vmax.f32 %v237, %v238
    %v240 = vrot.slane %v239, 1
    %v241 = vmax.f32 %v239, %v240
    %v242 = vmax.f32 %v227, %v233
    %v243 = vrot.slane %v242, 4
    %v244 = vmax.f32 %v242, %v243
    %v245 = vrot.slane %v244, 2
    %v246 = vmax.f32 %v244, %v245
    %v247 = vrot.slane %v246, 1
    %v248 = vmax.f32 %v246, %v247
    %v249 = vsub.f32 %v225, %v241
    %v250 = vsub.f32 %v227, %v248
    %v251 = vsub.f32 %v231, %v241
    %v252 = vsub.f32 %v233, %v248
    %v253 = vmul.f32 %v249, 1.442695
    %v254 = vpow.pop %v253
    %v255 = vmul.f32 %v250, 1.442695
    %v256 = vpow.pop %v255
    %v257 = vmul.f32 %v251, 1.442695
    %v258 = vpow.pop %v257
    %v259 = vmul.f32 %v252, 1.442695
    %v260 = vpow.pop %v259
    %v261 = vadd.f32 %v254, %v258
    %v262 = vrot.slane %v261, 4
    %v263 = vadd.f32 %v261, %v262
    %v264 = vrot.slane %v263, 2
    %v265 = vadd.f32 %v263, %v264
    %v266 = vrot.slane %v265, 1
    %v267 = vadd.f32 %v265, %v266
    %v268 = vadd.f32 %v256, %v260
    %v269 = vrot.slane %v268, 4
    %v270 = vadd.f32 %v268, %v269
    %v271 = vrot.slane %v270, 2
    %v272 = vadd.f32 %v270, %v271
    %v273 = vrot.slane %v272, 1
    %v274 = vadd.f32 %v272, %v273
    %v275 = vrcp.pop %v267
    %v276 = vmul.f32 1.0, %v275
    %v277 = vrcp.pop %v274
    %v278 = vmul.f32 1.0, %v277
    %v279 = vmul.f32 %v254, %v276
    %v280 = vmul.f32 %v256, %v278
    %v281 = vld [vmem:[%s1] sm:$0x3]
    %v282 = vadd.s32 %v48, 128
    %v283 = vsub.f32 1.0, %v279
    %v284 = vsub.f32 1.0, %v280
    %v285 = vmul.f32 %v283, %v283
    %v286 = vmul.f32 %v284, %v284
    %v287 = vmul.f32 %v279, %v279
    %v288 = vmul.f32 %v280, %v280
    %s289 = smul.u32 0, 256
    %v290 = vstv %s289
    %v291 = vadd.s32 %v290, %v48
    %v292 = vadd.s32 %v290, %v282
    %vm293 = vcmp.lt.s32.totalorder %v291, 256
    %vm294 = vcmp.lt.s32.totalorder %v292, 256
    %vm295 = vcmp.eq.s32.totalorder %v281, 3
    %v296 = vsel %vm295, 1, 0
    %v297 = vlaneseq
    %v298 = vshrl.u32 %v297, 7
    %v299 = vsub.s32 0, %v298
    %v300 = vrot.slane %v296, %v299
    %v301 = vlaneseq
    %v302 = vshrl.u32 %v301, 7
    %v303 = vsub.s32 1, %v302
    %v304 = vrot.slane %v296, %v303
    %vm305 = vcmp.ne.s32.totalorder %v300, 0
    %vm306 = vcmp.ne.s32.totalorder %v304, 0
    %vm307 = vmand %vm293, %vm305
    %vm308 = vmand %vm294, %vm306
    %vm309 = vmxor %vm295, 1
    %v310 = vsel %vm309, 1, 0
    %v311 = vlaneseq
    %v312 = vshrl.u32 %v311, 7
    %v313 = vsub.s32 0, %v312
    %v314 = vrot.slane %v310, %v313
    %v315 = vlaneseq
    %v316 = vshrl.u32 %v315, 7
    %v317 = vsub.s32 1, %v316
    %v318 = vrot.slane %v310, %v317
    %vm319 = vcmp.ne.s32.totalorder %v314, 0
    %vm320 = vcmp.ne.s32.totalorder %v318, 0
    %vm321 = vmand %vm293, %vm319
    %vm322 = vmand %vm294, %vm320
    %v325 = vrot.slane %v285, 3
    %v326 = vrot.slane %v286, 3
    %v329 = vsel %vm307, %v325, 0.0
    %v330 = vsel %vm308, %v326, 0.0
    %vm331 = vcmask 1040384
    %v332 = vsel %vm331, %v329, 0.0
    %v333 = vsel %vm331, %v330, 0.0
    %v334 = vadd.f32 %v332, %v333
    %335 = vadd.xlane.f32.xlu0 %v334
    %v336 = vpop.xlane.xlu0 %335
    %v337 = vrot.slane %v336, 4
    %v338 = vadd.f32 %v336, %v337
    %v339 = vrot.slane %v338, 2
    %v340 = vadd.f32 %v338, %v339
    %v341 = vrot.slane %v340, 1
    %v342 = vadd.f32 %v340, %v341
    %s343 = vtos %v342
    %v346 = vrot.slane %v287, 3
    %v347 = vrot.slane %v288, 3
    %v350 = vsel %vm321, %v346, 0.0
    %v351 = vsel %vm322, %v347, 0.0
    %v352 = vsel %vm331, %v350, 0.0
    %v353 = vsel %vm331, %v351, 0.0
    %v354 = vadd.f32 %v352, %v353
    %355 = vadd.xlane.f32.xlu0 %v354
    %v356 = vpop.xlane.xlu0 %355
    %v357 = vrot.slane %v356, 4
    %v358 = vadd.f32 %v356, %v357
    %v359 = vrot.slane %v358, 2
    %v360 = vadd.f32 %v358, %v359
    %v361 = vrot.slane %v360, 1
    %v362 = vadd.f32 %v360, %v361
    %s363 = vtos %v362
    %v364 = vsel %vm307, 1, 0
    %v365 = vsel %vm308, 1, 0
    %v366 = vcvt.s32.f32 %v364
    %v367 = vcvt.s32.f32 %v365
    %v368 = vsel %vm331, %v366, 0.0
    %v369 = vsel %vm331, %v367, 0.0
    %v370 = vadd.f32 %v368, %v369
    %371 = vadd.xlane.f32.xlu0 %v370
    %v372 = vpop.xlane.xlu0 %371
    %v373 = vrot.slane %v372, 4
    %v374 = vadd.f32 %v372, %v373
    %v375 = vrot.slane %v374, 2
    %v376 = vadd.f32 %v374, %v375
    %v377 = vrot.slane %v376, 1
    %v378 = vadd.f32 %v376, %v377
    %s379 = vtos %v378
    %vm380 = vcmp.eq.s32.totalorder %v48, 0
    %v381 = vstv %s343
    %v382 = vsel %vm380, %v381, 0.0
    %vm383 = vcmp.eq.s32.totalorder %v48, 1
    %v384 = vstv %s363
    %v385 = vsel %vm383, %v384, %v382
    %vm386 = vcmp.eq.s32.totalorder %v48, 2
    %v387 = vstv %s379
    %v388 = vsel %vm386, %v387, %v385
    %389 = vst [vmem:[#allocation2] sm:$0xff] %v388
    // Predicated region
    $region10: #{tpu_custom_call.1} parent=1 // pred_check
      _
    $region11: #{tpu_custom_call.1} parent=1 // pred_check_branch
      %391 = sbr.rel (0) target = $region13
    $region12: #{tpu_custom_call.1} parent=1 // pred_region
      %s393 = ssub.s32 128, 128
      %394 = vsyncadd [#allocation3], %s393
      %s396 = sshll.u32 [#allocation2], 4
      %s397 = int_to_ptr.vmem [resolvable:$true] %s396
      %399 = dma.vmem_to_hbm [thread:$0]  %s397, 128, %s2, [#allocation3]
    $region13: #{tpu_custom_call.1} parent=1 // pred_fallthru
      _
    // Predicated region
    $region14: #{tpu_custom_call.1} parent=1 // pred_check
      _
    $region15: #{tpu_custom_call.1} parent=1 // pred_check_branch
      %401 = sbr.rel (0) target = $region17
    $region16: #{tpu_custom_call.1} parent=1 // pred_region
      %402 = dma.done [#allocation3], 128
    $region17: #{tpu_custom_call.1} parent=1 // pred_fallthru
      _
    %403 = vsyncpa [#allocation3], 1

</llo_original>
